<compile_context>
chip_gen: v6e
topology: v6e:2x2x1
jax: 0.10.0
libtpu: 0.0.40
codegen_flags: <defaults>
</compile_context>

<pallas_src>
import jax
import jax.numpy as jnp
from jax.experimental import pallas as pl
from jax.experimental.pallas import tpu as pltpu

_NEG_INF = -1e30


def _round_up(x, m):
    return (x + m - 1) // m * m


def _char_rnn_seq_kernel(ids_ref,                                   # SMEM int32[T*B]
                         h0_ref, wx_ref, wh_ref, bu_ref, wo_ref, bo_ref,  # VMEM resident
                         h_out_ref, lp_out_ref,                     # per-step outputs
                         h_carry):                                  # VMEM scratch carry
    t = pl.program_id(0)
    B, Hp = h_carry.shape
    Vp = bo_ref.shape[-1]

    @pl.when(t == 0)
    def _():
        h_carry[...] = h0_ref[...]

    # In-kernel embedding lookup: one-hot encode this step's B ids (scalar reads
    # from SMEM -> VPU selects) and push them through the MXU against wx_ref,
    # which holds pad(emb @ W_e).  No wrapper-side gather, no x_emb round-trip.
    row_ids = jax.lax.broadcasted_iota(jnp.int32, (B, Vp), 0)
    col_ids = jax.lax.broadcasted_iota(jnp.int32, (B, Vp), 1)
    wanted = jnp.zeros((B, Vp), jnp.int32)
    for b in range(B):                                # B is small & static -> unrolled
        wanted = jnp.where(row_ids == b, ids_ref[t * B + b], wanted)
    onehot = (col_ids == wanted).astype(jnp.float32)  # [B, Vp]

    h_prev = h_carry[...]                             # [B, Hp]; cols >= H are exactly 0
    pre = (jnp.dot(onehot, wx_ref[...], preferred_element_type=jnp.float32)
           + jnp.dot(h_prev, wh_ref[...], preferred_element_type=jnp.float32)
           + bu_ref[...])
    h_next = jnp.tanh(pre)                            # padded cols: tanh(0) == 0
    h_carry[...] = h_next

    logits = (jnp.dot(h_next, wo_ref[...], preferred_element_type=jnp.float32)
              + bo_ref[...])                          # padded vocab cols sit at -1e30
    m = jnp.max(logits, axis=-1, keepdims=True)
    shifted = logits - m
    lse = jnp.log(jnp.sum(jnp.exp(shifted), axis=-1, keepdims=True))
    log_probs = shifted - lse

    h_out_ref[0] = h_next.astype(h_out_ref.dtype)
    lp_out_ref[0] = log_probs.astype(lp_out_ref.dtype)


def char_rnn_sequence(xs, h0, params):
    """Run CharRNNCell over a whole sequence in a single fused Pallas kernel.

    xs     : int32[T, B]  character indices for every step
    h0     : f32[B, H]    initial hidden state
    params : dict with 'emb' [V,E], 'W_e' [E,H], 'W_h' [H,H], 'b_u' [H],
             'W_o' [H,V], 'b_o' [V]   (same math as the PyTorch module)
    returns (h_all f32[T,B,H], log_probs f32[T,B,V], h_last f32[B,H])
    """
    T, B = xs.shape
    V, E = params["emb"].shape
    H = params["W_h"].shape[0]
    Vp, Hp = _round_up(V, 128), _round_up(H, 128)
    Bp = _round_up(B, 8)                              # sublane alignment
    f32 = jnp.float32

    # --- one-time weight packing / padding (layout prep, done once per call) ---
    # Fold the embedding table into the x-half of rnn_update:
    #   onehot @ (emb @ W_e) == (gathered emb) @ W_e
    W_x = jnp.dot(params["emb"], params["W_e"], precision=jax.lax.Precision.HIGHEST)
    W_x_p = jnp.zeros((Vp, Hp), f32).at[:V, :H].set(W_x)
    W_h_p = jnp.zeros((Hp, Hp), f32).at[:H, :H].set(params["W_h"])
    b_u_p = jnp.zeros((1, Hp), f32).at[0, :H].set(params["b_u"])
    W_o_p = jnp.zeros((Hp, Vp), f32).at[:H, :V].set(params["W_o"])
    b_o_p = jnp.full((1, Vp), _NEG_INF, f32).at[0, :V].set(params["b_o"])
    # TODO(synk): for DMA-bound deployments store W_* in bf16 (keep f32 accumulate);
    # kept f32 here so the reference check stays tight.

    ids = jnp.zeros((T, Bp), jnp.int32).at[:, :B].set(xs.astype(jnp.int32)).reshape(-1)
    h0_p = jnp.zeros((Bp, Hp), f32).at[:B, :H].set(h0)

    def resident(shape):  # full-array block, same block every step -> no re-DMA
        return pl.BlockSpec(shape, lambda t, ids_ref: (0,) * len(shape))

    grid_spec = pltpu.PrefetchScalarGridSpec(
        num_scalar_prefetch=1,
        grid=(T,),
        in_specs=[
            resident((Bp, Hp)),        # h0
            resident((Vp, Hp)),        # W_x  (emb @ W_e, padded)
            resident((Hp, Hp)),        # W_h
            resident((1, Hp)),         # b_u
            resident((Hp, Vp)),        # W_o
            resident((1, Vp)),         # b_o
        ],
        out_specs=(
            pl.BlockSpec((1, Bp, Hp), lambda t, ids_ref: (t, 0, 0)),
            pl.BlockSpec((1, Bp, Vp), lambda t, ids_ref: (t, 0, 0)),
        ),
        scratch_shapes=[pltpu.VMEM((Bp, Hp), f32)],
    )
    cost = pl.CostEstimate(
        flops=2 * T * Bp * Hp * (Vp + Hp + Vp),
        transcendentals=T * Bp * (Hp + 2 * Vp),
        bytes_accessed=4 * (ids.size + h0_p.size + W_x_p.size + W_h_p.size
                            + b_u_p.size + W_o_p.size + b_o_p.size
                            + T * Bp * (Hp + Vp)),
    )

    h_all_p, lp_all_p = pl.pallas_call(
        _char_rnn_seq_kernel,
        grid_spec=grid_spec,
        out_shape=(jax.ShapeDtypeStruct((T, Bp, Hp), f32),
                   jax.ShapeDtypeStruct((T, Bp, Vp), f32)),
        compiler_params=pltpu.CompilerParams(
            # Time is a carried recurrence -> sequential.
            # TODO(synk): for large B on v7x add a leading "parallel" batch grid axis
            # so both TensorCores are used; at B=8 a single core is correct.
            dimension_semantics=("arbitrary",)),
        cost_estimate=cost,
    )(ids, h0_p, W_x_p, W_h_p, b_u_p, W_o_p, b_o_p)

    return h_all_p[:, :B, :H], lp_all_p[:, :B, :V], h_all_p[-1, :B, :H]


def char_rnn_cell(x, h_prev, params):
    """Single CharRNNCell.forward step (T == 1 case of the fused kernel)."""
    h_all, lp_all, _ = char_rnn_sequence(x[None, :], h_prev, params)
    return h_all[0], lp_all[0]


def init_params(key, num_tokens, embedding_size, rnn_num_units):
    """Deterministic synthetic parameters (torch-like uniform init)."""
    k_emb, k_wu, k_bu, k_wo, k_bo = jax.random.split(key, 5)
    E, H, V = embedding_size, rnn_num_units, num_tokens

    emb = jax.random.normal(k_emb, (V, E), jnp.float32)

    # nn.Linear(E+H, H): weight [H, E+H], uniform(-1/sqrt(E+H), 1/sqrt(E+H))
    bound_u = 1.0 / jnp.sqrt(E + H)
    W_upd = jax.random.uniform(k_wu, (H, E + H), jnp.float32, -bound_u, bound_u)
    b_u = jax.random.uniform(k_bu, (H,), jnp.float32, -bound_u, bound_u)
    W_e = W_upd[:, :E].T          # [E, H]
    W_h = W_upd[:, E:].T          # [H, H]

    # nn.Linear(H, V): weight [V, H]
    bound_o = 1.0 / jnp.sqrt(H)
    W_out = jax.random.uniform(k_wo, (V, H), jnp.float32, -bound_o, bound_o)
    b_o = jax.random.uniform(k_bo, (V,), jnp.float32, -bound_o, bound_o)
    W_o = W_out.T                 # [H, V]

    return {"emb": emb, "W_e": W_e, "W_h": W_h, "b_u": b_u,
            "W_o": W_o, "b_o": b_o}


def reference_step(x, h_prev, params):
    """Pure-JAX reference for one CharRNNCell.forward step."""
    x_emb = jnp.take(params["emb"], x, axis=0)
    cat = jnp.concatenate([x_emb, h_prev], axis=1)
    W_u = jnp.concatenate([params["W_e"], params["W_h"]], axis=0)  # [E+H, H]
    h_next = jnp.tanh(cat @ W_u + params["b_u"])
    logits = h_next @ params["W_o"] + params["b_o"]
    return h_next, jax.nn.log_softmax(logits, axis=-1)


if __name__ == "__main__":
    num_tokens = 32
    embedding_size = 16
    rnn_num_units = 64
    batch = 8
    seq_len = 12

    key = jax.random.PRNGKey(0)
    k_params, k_x, k_h = jax.random.split(key, 3)

    params = init_params(k_params, num_tokens, embedding_size, rnn_num_units)
    xs = jax.random.randint(k_x, (seq_len, batch), 0, num_tokens, jnp.int32)
    h0 = jax.random.normal(k_h, (batch, rnn_num_units), jnp.float32)

    # fused-sequence kernel (the hot path)
    seq_fn = jax.jit(char_rnn_sequence)
    h_all, lp_all, h_last = seq_fn(xs, h0, params)
    jax.block_until_ready((h_all, lp_all, h_last))

    # pure-JAX reference: unrolled loop of the single-step module forward
    h = h0
    h_refs, lp_refs = [], []
    for t in range(seq_len):
        h, lp = reference_step(xs[t], h, params)
        h_refs.append(h)
        lp_refs.append(lp)
    h_ref = jnp.stack(h_refs)
    lp_ref = jnp.stack(lp_refs)

    assert jnp.allclose(h_all, h_ref, atol=1e-3, rtol=1e-3), "hidden-state mismatch"
    assert jnp.allclose(lp_all, lp_ref, atol=1e-3, rtol=1e-3), "log-prob mismatch"
    assert jnp.allclose(h_last, h_ref[-1], atol=1e-3, rtol=1e-3), "final state mismatch"

    # single-step API, matching CharRNNCell.forward exactly
    h1, lp1 = char_rnn_cell(xs[0], h0, params)
    jax.block_until_ready((h1, lp1))
    h1_ref, lp1_ref = reference_step(xs[0], h0, params)
    assert jnp.allclose(h1, h1_ref, atol=1e-4, rtol=1e-4), "single-step h mismatch"
    assert jnp.allclose(lp1, lp1_ref, atol=1e-4, rtol=1e-4), "single-step lp mismatch"

    print("KERNEL_OK")
</pallas_src>

<mosaic_0001>
module attributes {stable_mosaic.version = 11 : i64} {
  func.func @_char_rnn_seq_kernel(%arg0: i32, %arg1: memref<96xi32, #tpu.memory_space<smem>>, %arg2: memref<8x128xf32, #tpu.memory_space<vmem>>, %arg3: memref<128x128xf32, #tpu.memory_space<vmem>>, %arg4: memref<128x128xf32, #tpu.memory_space<vmem>>, %arg5: memref<1x128xf32, #tpu.memory_space<vmem>>, %arg6: memref<128x128xf32, #tpu.memory_space<vmem>>, %arg7: memref<1x128xf32, #tpu.memory_space<vmem>>, %arg8: memref<1x8x128xf32, #tpu.memory_space<vmem>>, %arg9: memref<1x8x128xf32, #tpu.memory_space<vmem>>, %arg10: memref<8x128xf32, #tpu.memory_space<vmem>>) attributes {dimension_semantics = [#tpu.dimension_semantics<arbitrary>], iteration_bounds = array<i64: 12>, scalar_prefetch = 1 : i64, scratch_operands = 1 : i64, tpu.core_type = #tpu.core_type<tc>, window_params = [{pipeline_mode = #tpu.pipeline_mode<synchronous>, transform_indices = @transform_0, window_bounds = array<i64: 8, 128>}, {pipeline_mode = #tpu.pipeline_mode<synchronous>, transform_indices = @transform_1, window_bounds = array<i64: 128, 128>}, {pipeline_mode = #tpu.pipeline_mode<synchronous>, transform_indices = @transform_2, window_bounds = array<i64: 128, 128>}, {pipeline_mode = #tpu.pipeline_mode<synchronous>, transform_indices = @transform_3, window_bounds = array<i64: 1, 128>}, {pipeline_mode = #tpu.pipeline_mode<synchronous>, transform_indices = @transform_4, window_bounds = array<i64: 128, 128>}, {pipeline_mode = #tpu.pipeline_mode<synchronous>, transform_indices = @transform_5, window_bounds = array<i64: 1, 128>}, {transform_indices = @transform_6, window_bounds = array<i64: 1, 8, 128>}, {transform_indices = @transform_7, window_bounds = array<i64: 1, 8, 128>}]} {
    %c0_i32 = arith.constant 0 : i32
    %0 = arith.cmpi eq, %arg0, %c0_i32 : i32
    %1 = arith.extui %0 : i1 to i32
    %c0_i32_0 = arith.constant 0 : i32
    %2 = arith.cmpi ne, %1, %c0_i32_0 : i32
    scf.if %2 {
      %c0_41 = arith.constant 0 : index
      %c0_42 = arith.constant 0 : index
      %105 = vector.load %arg2[%c0_41, %c0_42] : memref<8x128xf32, #tpu.memory_space<vmem>>, vector<8x128xf32>
      %c0_43 = arith.constant 0 : index
      %c0_44 = arith.constant 0 : index
      %106 = vector.load %arg10[%c0_43, %c0_44] : memref<8x128xf32, #tpu.memory_space<vmem>>, vector<8x128xf32>
      tpu.vector_store %arg10[%c0_43, %c0_44], %105 {strides = array<i32>} : memref<8x128xf32, #tpu.memory_space<vmem>>, vector<8x128xf32>,
    } else {
    }
    %3 = tpu.iota {dimensions = array<i32: 0>} : vector<8x128xi32>
    %4 = tpu.iota {dimensions = array<i32: 1>} : vector<8x128xi32>
    %c0_i32_1 = arith.constant 0 : i32
    %5 = vector.broadcast %c0_i32_1 : i32 to vector<8x128xi32>
    %c0_i32_2 = arith.constant 0 : i32
    %6 = vector.broadcast %c0_i32_2 : i32 to vector<8x128xi32>
    %7 = arith.cmpi eq, %3, %6 : vector<8x128xi32>
    %c8_i32 = arith.constant 8 : i32
    %8 = arith.muli %arg0, %c8_i32 : i32
    %c0_i32_3 = arith.constant 0 : i32
    %9 = arith.addi %8, %c0_i32_3 : i32
    %10 = arith.index_cast %9 : i32 to index
    %11 = memref.load %arg1[%10] : memref<96xi32, #tpu.memory_space<smem>>
    %12 = vector.broadcast %11 : i32 to vector<8x128xi32>
    %13 = arith.select %7, %12, %5 : vector<8x128xi1>, vector<8x128xi32>
    %c1_i32 = arith.constant 1 : i32
    %14 = vector.broadcast %c1_i32 : i32 to vector<8x128xi32>
    %15 = arith.cmpi eq, %3, %14 : vector<8x128xi32>
    %c8_i32_4 = arith.constant 8 : i32
    %16 = arith.muli %arg0, %c8_i32_4 : i32
    %c1_i32_5 = arith.constant 1 : i32
    %17 = arith.addi %16, %c1_i32_5 : i32
    %18 = arith.index_cast %17 : i32 to index
    %19 = memref.load %arg1[%18] : memref<96xi32, #tpu.memory_space<smem>>
    %20 = vector.broadcast %19 : i32 to vector<8x128xi32>
    %21 = arith.select %15, %20, %13 : vector<8x128xi1>, vector<8x128xi32>
    %c2_i32 = arith.constant 2 : i32
    %22 = vector.broadcast %c2_i32 : i32 to vector<8x128xi32>
    %23 = arith.cmpi eq, %3, %22 : vector<8x128xi32>
    %c8_i32_6 = arith.constant 8 : i32
    %24 = arith.muli %arg0, %c8_i32_6 : i32
    %c2_i32_7 = arith.constant 2 : i32
    %25 = arith.addi %24, %c2_i32_7 : i32
    %26 = arith.index_cast %25 : i32 to index
    %27 = memref.load %arg1[%26] : memref<96xi32, #tpu.memory_space<smem>>
    %28 = vector.broadcast %27 : i32 to vector<8x128xi32>
    %29 = arith.select %23, %28, %21 : vector<8x128xi1>, vector<8x128xi32>
    %c3_i32 = arith.constant 3 : i32
    %30 = vector.broadcast %c3_i32 : i32 to vector<8x128xi32>
    %31 = arith.cmpi eq, %3, %30 : vector<8x128xi32>
    %c8_i32_8 = arith.constant 8 : i32
    %32 = arith.muli %arg0, %c8_i32_8 : i32
    %c3_i32_9 = arith.constant 3 : i32
    %33 = arith.addi %32, %c3_i32_9 : i32
    %34 = arith.index_cast %33 : i32 to index
    %35 = memref.load %arg1[%34] : memref<96xi32, #tpu.memory_space<smem>>
    %36 = vector.broadcast %35 : i32 to vector<8x128xi32>
    %37 = arith.select %31, %36, %29 : vector<8x128xi1>, vector<8x128xi32>
    %c4_i32 = arith.constant 4 : i32
    %38 = vector.broadcast %c4_i32 : i32 to vector<8x128xi32>
    %39 = arith.cmpi eq, %3, %38 : vector<8x128xi32>
    %c8_i32_10 = arith.constant 8 : i32
    %40 = arith.muli %arg0, %c8_i32_10 : i32
    %c4_i32_11 = arith.constant 4 : i32
    %41 = arith.addi %40, %c4_i32_11 : i32
    %42 = arith.index_cast %41 : i32 to index
    %43 = memref.load %arg1[%42] : memref<96xi32, #tpu.memory_space<smem>>
    %44 = vector.broadcast %43 : i32 to vector<8x128xi32>
    %45 = arith.select %39, %44, %37 : vector<8x128xi1>, vector<8x128xi32>
    %c5_i32 = arith.constant 5 : i32
    %46 = vector.broadcast %c5_i32 : i32 to vector<8x128xi32>
    %47 = arith.cmpi eq, %3, %46 : vector<8x128xi32>
    %c8_i32_12 = arith.constant 8 : i32
    %48 = arith.muli %arg0, %c8_i32_12 : i32
    %c5_i32_13 = arith.constant 5 : i32
    %49 = arith.addi %48, %c5_i32_13 : i32
    %50 = arith.index_cast %49 : i32 to index
    %51 = memref.load %arg1[%50] : memref<96xi32, #tpu.memory_space<smem>>
    %52 = vector.broadcast %51 : i32 to vector<8x128xi32>
    %53 = arith.select %47, %52, %45 : vector<8x128xi1>, vector<8x128xi32>
    %c6_i32 = arith.constant 6 : i32
    %54 = vector.broadcast %c6_i32 : i32 to vector<8x128xi32>
    %55 = arith.cmpi eq, %3, %54 : vector<8x128xi32>
    %c8_i32_14 = arith.constant 8 : i32
    %56 = arith.muli %arg0, %c8_i32_14 : i32
    %c6_i32_15 = arith.constant 6 : i32
    %57 = arith.addi %56, %c6_i32_15 : i32
    %58 = arith.index_cast %57 : i32 to index
    %59 = memref.load %arg1[%58] : memref<96xi32, #tpu.memory_space<smem>>
    %60 = vector.broadcast %59 : i32 to vector<8x128xi32>
    %61 = arith.select %55, %60, %53 : vector<8x128xi1>, vector<8x128xi32>
    %c7_i32 = arith.constant 7 : i32
    %62 = vector.broadcast %c7_i32 : i32 to vector<8x128xi32>
    %63 = arith.cmpi eq, %3, %62 : vector<8x128xi32>
    %c8_i32_16 = arith.constant 8 : i32
    %64 = arith.muli %arg0, %c8_i32_16 : i32
    %c7_i32_17 = arith.constant 7 : i32
    %65 = arith.addi %64, %c7_i32_17 : i32
    %66 = arith.index_cast %65 : i32 to index
    %67 = memref.load %arg1[%66] : memref<96xi32, #tpu.memory_space<smem>>
    %68 = vector.broadcast %67 : i32 to vector<8x128xi32>
    %69 = arith.select %63, %68, %61 : vector<8x128xi1>, vector<8x128xi32>
    %70 = arith.cmpi eq, %4, %69 : vector<8x128xi32>
    %71 = arith.extui %70 : vector<8x128xi1> to vector<8x128xi32>
    %72 = arith.sitofp %71 : vector<8x128xi32> to vector<8x128xf32>
    %c0 = arith.constant 0 : index
    %c0_18 = arith.constant 0 : index
    %73 = vector.load %arg10[%c0, %c0_18] : memref<8x128xf32, #tpu.memory_space<vmem>>, vector<8x128xf32>
    %c0_19 = arith.constant 0 : index
    %c0_20 = arith.constant 0 : index
    %74 = vector.load %arg3[%c0_19, %c0_20] : memref<128x128xf32, #tpu.memory_space<vmem>>, vector<128x128xf32>
    %cst = arith.constant dense<0.000000e+00> : vector<8x128xf32>
    %75 = tpu.matmul %72, %74, %cst {dimension_numbers = #tpu.dot_dimension_numbers<[1], [0], [0], [1], [0, 0, 1, 1], [], []>} : vector<8x128xf32>, vector<128x128xf32>, vector<8x128xf32> -> vector<8x128xf32>
    %c0_21 = arith.constant 0 : index
    %c0_22 = arith.constant 0 : index
    %76 = vector.load %arg4[%c0_21, %c0_22] : memref<128x128xf32, #tpu.memory_space<vmem>>, vector<128x128xf32>
    %cst_23 = arith.constant dense<0.000000e+00> : vector<8x128xf32>
    %77 = tpu.matmul %73, %76, %cst_23 {dimension_numbers = #tpu.dot_dimension_numbers<[1], [0], [0], [1], [0, 0, 1, 1], [], []>} : vector<8x128xf32>, vector<128x128xf32>, vector<8x128xf32> -> vector<8x128xf32>
    %78 = arith.addf %75, %77 : vector<8x128xf32>
    %c0_24 = arith.constant 0 : index
    %c0_25 = arith.constant 0 : index
    %79 = vector.load %arg5[%c0_24, %c0_25] : memref<1x128xf32, #tpu.memory_space<vmem>>, vector<1x128xf32>
    %80 = vector.broadcast %79 : vector<1x128xf32> to vector<8x128xf32>
    %81 = arith.addf %78, %80 : vector<8x128xf32>
    %82 = math.tanh %81 : vector<8x128xf32>
    %c0_26 = arith.constant 0 : index
    %c0_27 = arith.constant 0 : index
    %83 = vector.load %arg10[%c0_26, %c0_27] : memref<8x128xf32, #tpu.memory_space<vmem>>, vector<8x128xf32>
    tpu.vector_store %arg10[%c0_26, %c0_27], %82 {strides = array<i32>} : memref<8x128xf32, #tpu.memory_space<vmem>>, vector<8x128xf32>,
    %c0_28 = arith.constant 0 : index
    %c0_29 = arith.constant 0 : index
    %84 = vector.load %arg6[%c0_28, %c0_29] : memref<128x128xf32, #tpu.memory_space<vmem>>, vector<128x128xf32>
    %cst_30 = arith.constant dense<0.000000e+00> : vector<8x128xf32>
    %85 = tpu.matmul %82, %84, %cst_30 {dimension_numbers = #tpu.dot_dimension_numbers<[1], [0], [0], [1], [0, 0, 1, 1], [], []>} : vector<8x128xf32>, vector<128x128xf32>, vector<8x128xf32> -> vector<8x128xf32>
    %c0_31 = arith.constant 0 : index
    %c0_32 = arith.constant 0 : index
    %86 = vector.load %arg7[%c0_31, %c0_32] : memref<1x128xf32, #tpu.memory_space<vmem>>, vector<1x128xf32>
    %87 = vector.broadcast %86 : vector<1x128xf32> to vector<8x128xf32>
    %88 = arith.addf %85, %87 : vector<8x128xf32>
    %cst_33 = arith.constant dense<0xFF800000> : vector<8xf32>
    %89 = vector.multi_reduction <maximumf>, %88, %cst_33 [1] : vector<8x128xf32> to vector<8xf32>
    %90 = vector.shape_cast %89 : vector<8xf32> to vector<8x1xf32>
    %91 = vector.broadcast %90 : vector<8x1xf32> to vector<8x128xf32>
    %92 = arith.subf %88, %91 : vector<8x128xf32>
    %93 = math.exp %92 : vector<8x128xf32>
    %cst_34 = arith.constant dense<0.000000e+00> : vector<8xf32>
    %94 = vector.multi_reduction <add>, %93, %cst_34 [1] : vector<8x128xf32> to vector<8xf32>
    %95 = vector.shape_cast %94 : vector<8xf32> to vector<8x1xf32>
    %96 = math.log %95 : vector<8x1xf32>
    %97 = vector.broadcast %96 : vector<8x1xf32> to vector<8x128xf32>
    %98 = arith.subf %92, %97 : vector<8x128xf32>
    %c0_35 = arith.constant 0 : index
    %c0_36 = arith.constant 0 : index
    %c0_37 = arith.constant 0 : index
    %99 = vector.load %arg8[%c0_35, %c0_36, %c0_37] : memref<1x8x128xf32, #tpu.memory_space<vmem>>, vector<1x8x128xf32>
    %100 = vector.shape_cast %99 : vector<1x8x128xf32> to vector<8x128xf32>
    %101 = vector.shape_cast %82 : vector<8x128xf32> to vector<1x8x128xf32>
    tpu.vector_store %arg8[%c0_35, %c0_36, %c0_37], %101 {strides = array<i32>} : memref<1x8x128xf32, #tpu.memory_space<vmem>>, vector<1x8x128xf32>,
    %c0_38 = arith.constant 0 : index
    %c0_39 = arith.constant 0 : index
    %c0_40 = arith.constant 0 : index
    %102 = vector.load %arg9[%c0_38, %c0_39, %c0_40] : memref<1x8x128xf32, #tpu.memory_space<vmem>>, vector<1x8x128xf32>
    %103 = vector.shape_cast %102 : vector<1x8x128xf32> to vector<8x128xf32>
    %104 = vector.shape_cast %98 : vector<8x128xf32> to vector<1x8x128xf32>
    tpu.vector_store %arg9[%c0_38, %c0_39, %c0_40], %104 {strides = array<i32>} : memref<1x8x128xf32, #tpu.memory_space<vmem>>, vector<1x8x128xf32>,
    return
  }
  func.func @transform_0(%arg0: i32, %arg1: memref<96xi32, #tpu.memory_space<smem>>) -> (i32, i32) {
    %c0_i32 = arith.constant 0 : i32
    %c0_i32_0 = arith.constant 0 : i32
    %c0_i32_1 = arith.constant 0 : i32
    return %c0_i32, %c0_i32_0 : i32, i32
  }
  func.func @transform_1(%arg0: i32, %arg1: memref<96xi32, #tpu.memory_space<smem>>) -> (i32, i32) {
    %c0_i32 = arith.constant 0 : i32
    %c0_i32_0 = arith.constant 0 : i32
    %c0_i32_1 = arith.constant 0 : i32
    return %c0_i32, %c0_i32_0 : i32, i32
  }
  func.func @transform_2(%arg0: i32, %arg1: memref<96xi32, #tpu.memory_space<smem>>) -> (i32, i32) {
    %c0_i32 = arith.constant 0 : i32
    %c0_i32_0 = arith.constant 0 : i32
    %c0_i32_1 = arith.constant 0 : i32
    return %c0_i32, %c0_i32_0 : i32, i32
  }
  func.func @transform_3(%arg0: i32, %arg1: memref<96xi32, #tpu.memory_space<smem>>) -> (i32, i32) {
    %c0_i32 = arith.constant 0 : i32
    %c0_i32_0 = arith.constant 0 : i32
    %c0_i32_1 = arith.constant 0 : i32
    return %c0_i32, %c0_i32_0 : i32, i32
  }
  func.func @transform_4(%arg0: i32, %arg1: memref<96xi32, #tpu.memory_space<smem>>) -> (i32, i32) {
    %c0_i32 = arith.constant 0 : i32
    %c0_i32_0 = arith.constant 0 : i32
    %c0_i32_1 = arith.constant 0 : i32
    return %c0_i32, %c0_i32_0 : i32, i32
  }
  func.func @transform_5(%arg0: i32, %arg1: memref<96xi32, #tpu.memory_space<smem>>) -> (i32, i32) {
    %c0_i32 = arith.constant 0 : i32
    %c0_i32_0 = arith.constant 0 : i32
    %c0_i32_1 = arith.constant 0 : i32
    return %c0_i32, %c0_i32_0 : i32, i32
  }
  func.func @transform_6(%arg0: i32, %arg1: memref<96xi32, #tpu.memory_space<smem>>) -> (i32, i32, i32) {
    %c0_i32 = arith.constant 0 : i32
    %c0_i32_0 = arith.constant 0 : i32
    %c0_i32_1 = arith.constant 0 : i32
    return %arg0, %c0_i32, %c0_i32_0 : i32, i32, i32
  }
  func.func @transform_7(%arg0: i32, %arg1: memref<96xi32, #tpu.memory_space<smem>>) -> (i32, i32, i32) {
    %c0_i32 = arith.constant 0 : i32
    %c0_i32_0 = arith.constant 0 : i32
    %c0_i32_1 = arith.constant 0 : i32
    return %arg0, %c0_i32, %c0_i32_0 : i32, i32, i32
  }
}

</mosaic_0001>

<llo_original>
// kernel: char_rnn_sequence.1
$region0: #{char_rnn_sequence.1}
  #allocation0 [shape = 'u32[]', space=smem, size = 0x4, offset = 0x4, fixed_abs, tag = 'smem constant byte address 0x4 - core index']
  #allocation1 [shape = 'u32[144,128]{1,0:T(1,128)}', space=vmem, size = 0x12000, scoped, tag = 'internal scratch']
  #allocation2 [shape = 'f32[8,128]{1,0:T(8,128)}', space=vmem, size = 0x1000, scoped, tag = 'scratch operand']
  #allocation3 [shape = 's32[1]{0}', space=sflag, size = 0x4, scoped, tag = 'scoped memory for char_rnn_sequence.1']
  #allocation4 [shape = 'u8[512]{0}', space=smem, size = 0x200, scoped, tag = 'prefetched SMEM operand 0']
  %s0 = inlined_call_operand.vmem [shape: s32[96], index: 0, kind: input, shape index: {}]
  %s1 = inlined_call_operand.vmem [shape: f32[8,128], index: 1, kind: input, shape index: {}]
  %s2 = inlined_call_operand.vmem [shape: f32[128,128], index: 2, kind: input, shape index: {}]
  %s3 = inlined_call_operand.vmem [shape: f32[128,128], index: 3, kind: input, shape index: {}]
  %s4 = inlined_call_operand.vmem [shape: f32[1,128], index: 4, kind: input, shape index: {}]
  %s5 = inlined_call_operand.vmem [shape: f32[128,128], index: 5, kind: input, shape index: {}]
  %s6 = inlined_call_operand.vmem [shape: f32[1,128], index: 6, kind: input, shape index: {}]
  %s7 = inlined_call_operand.vmem [shape: f32[12,8,128], index: 7, kind: output, shape index: {0}]
  %s8 = inlined_call_operand.hbm [shape: f32[12,8,128], index: 8, kind: output, shape index: {1}]
  %9 = xla_tuple %s7, %s8
  %s10 = sld [smem:[#allocation0]]
  $region69: #{char_rnn_sequence.1} parent=0
    _
  %s12 = ssub.s32 1, %s10
  %s13 = scalar_select 0, %s12, %s10
  %s14 = sshll.u32 %s0, 4
  %s15 = int_to_ptr.vmem [resolvable:$true] %s14
  %17 = dma.vmem_to_smem %s15, 16, [#allocation4], [#allocation3]
  %18 = dma.done [#allocation3], 16
  %19 = sfence
  $region1: #{char_rnn_sequence.1} parent=0
    #allocation5 [shape = 'u8[8192]{0}', space=vmem, size = 0x2000, scoped, tag = 'output window, operand 1']
    #allocation6 [shape = 's32[2]{0}', space=sflag, size = 0x8, scoped, tag = 'scoped memory for char_rnn_sequence.1']
    %20 = vsyncpa [#allocation6], 0
    %s21 = scalar_lea.sflag [#allocation6], 1
    %22 = vsyncpa %s21, 0
    loop: start=0, step=1, limit=14
    $region2: #{char_rnn_sequence.1} parent=1 // loop_pre_header
      _
    $region3: #{char_rnn_sequence.1} parent=1 // loop_header
      %s24 = sphi 0, %s28
      %p25 = scmp.ge.s32.totalorder %s24, 14
      %s32 = sphi 0, %s32
      %s34 = sphi 0, %s32
      %s35 = sphi 0, %s34
      %s49 = sphi 0, %s35
      %s53 = sphi 0, %s53
      %s55 = sphi 0, %s53
      %s56 = sphi 0, %s55
      %s70 = sphi 0, %s56
      %s74 = sphi 0, %s74
      %s76 = sphi 0, %s74
      %s77 = sphi 0, %s76
      %s91 = sphi 0, %s77
      %s95 = sphi 0, %s95
      %s97 = sphi 0, %s95
      %s98 = sphi 0, %s97
      %s112 = sphi 0, %s98
      %s116 = sphi 0, %s116
      %s118 = sphi 0, %s116
      %s119 = sphi 0, %s118
      %s133 = sphi 0, %s119
      %s137 = sphi 0, %s137
      %s139 = sphi 0, %s137
      %s140 = sphi 0, %s139
      %s154 = sphi 0, %s140
      %s160 = sphi 0, %s162
      %s163 = sphi 0, %s160
      %s164 = sphi 0, %s163
      %s180 = sphi 0, %s164
      %s186 = sphi 0, %s188
      %s189 = sphi 0, %s186
      %s190 = sphi 0, %s189
      %s206 = sphi 0, %s190
    $region4: #{char_rnn_sequence.1} parent=1 // loop_header_branch
      %27 = sbr.rel (%p25) target = $region8
    $region5: #{char_rnn_sequence.1} parent=1 // loop_body
      %s29 = ssub.s32 %s24, 1
      %s30 = ssub.s32 %s24, 2
      %s31 = sadd.s32 %s24, 1
      %s33 = sadd.s32 %s32, 1
      %p36 = scmp.eq.s32.totalorder %s24, 11
      %p37 = scmp.ne.s32.totalorder %s32, %s34
      %p38 = scmp.eq.s32.totalorder %s24, 0
      %p39 = por %p37, %p38
      %p40 = scmp.ne.s32.totalorder %s32, %s34
      %p41 = scmp.eq.s32.totalorder %s29, 11
      %p42 = por %p40, %p41
      %p43 = scmp.ne.s32.totalorder %s34, %s35
      %p44 = scmp.eq.s32.totalorder %s29, 0
      %p45 = por %p43, %p44
      %p46 = scmp.ne.s32.totalorder %s34, %s35
      %p47 = scmp.eq.s32.totalorder %s30, 11
      %p48 = por %p46, %p47
      %p50 = scmp.ne.s32.totalorder %s35, %s49
      %p51 = scmp.eq.s32.totalorder %s30, 0
      %p52 = por %p50, %p51
      %s54 = sadd.s32 %s53, 1
      %p57 = scmp.eq.s32.totalorder %s24, 11
      %p58 = scmp.ne.s32.totalorder %s53, %s55
      %p59 = scmp.eq.s32.totalorder %s24, 0
      %p60 = por %p58, %p59
      %p61 = scmp.ne.s32.totalorder %s53, %s55
      %p62 = scmp.eq.s32.totalorder %s29, 11
      %p63 = por %p61, %p62
      %p64 = scmp.ne.s32.totalorder %s55, %s56
      %p65 = scmp.eq.s32.totalorder %s29, 0
      %p66 = por %p64, %p65
      %p67 = scmp.ne.s32.totalorder %s55, %s56
      %p68 = scmp.eq.s32.totalorder %s30, 11
      %p69 = por %p67, %p68
      %p71 = scmp.ne.s32.totalorder %s56, %s70
      %p72 = scmp.eq.s32.totalorder %s30, 0
      %p73 = por %p71, %p72
      %s75 = sadd.s32 %s74, 1
      %p78 = scmp.eq.s32.totalorder %s24, 11
      %p79 = scmp.ne.s32.totalorder %s74, %s76
      %p80 = scmp.eq.s32.totalorder %s24, 0
      %p81 = por %p79, %p80
      %p82 = scmp.ne.s32.totalorder %s74, %s76
      %p83 = scmp.eq.s32.totalorder %s29, 11
      %p84 = por %p82, %p83
      %p85 = scmp.ne.s32.totalorder %s76, %s77
      %p86 = scmp.eq.s32.totalorder %s29, 0
      %p87 = por %p85, %p86
      %p88 = scmp.ne.s32.totalorder %s76, %s77
      %p89 = scmp.eq.s32.totalorder %s30, 11
      %p90 = por %p88, %p89
      %p92 = scmp.ne.s32.totalorder %s77, %s91
      %p93 = scmp.eq.s32.totalorder %s30, 0
      %p94 = por %p92, %p93
      %s96 = sadd.s32 %s95, 1
      %p99 = scmp.eq.s32.totalorder %s24, 11
      %p100 = scmp.ne.s32.totalorder %s95, %s97
      %p101 = scmp.eq.s32.totalorder %s24, 0
      %p102 = por %p100, %p101
      %p103 = scmp.ne.s32.totalorder %s95, %s97
      %p104 = scmp.eq.s32.totalorder %s29, 11
      %p105 = por %p103, %p104
      %p106 = scmp.ne.s32.totalorder %s97, %s98
      %p107 = scmp.eq.s32.totalorder %s29, 0
      %p108 = por %p106, %p107
      %p109 = scmp.ne.s32.totalorder %s97, %s98
      %p110 = scmp.eq.s32.totalorder %s30, 11
      %p111 = por %p109, %p110
      %p113 = scmp.ne.s32.totalorder %s98, %s112
      %p114 = scmp.eq.s32.totalorder %s30, 0
      %p115 = por %p113, %p114
      %s117 = sadd.s32 %s116, 1
      %p120 = scmp.eq.s32.totalorder %s24, 11
      %p121 = scmp.ne.s32.totalorder %s116, %s118
      %p122 = scmp.eq.s32.totalorder %s24, 0
      %p123 = por %p121, %p122
      %p124 = scmp.ne.s32.totalorder %s116, %s118
      %p125 = scmp.eq.s32.totalorder %s29, 11
      %p126 = por %p124, %p125
      %p127 = scmp.ne.s32.totalorder %s118, %s119
      %p128 = scmp.eq.s32.totalorder %s29, 0
      %p129 = por %p127, %p128
      %p130 = scmp.ne.s32.totalorder %s118, %s119
      %p131 = scmp.eq.s32.totalorder %s30, 11
      %p132 = por %p130, %p131
      %p134 = scmp.ne.s32.totalorder %s119, %s133
      %p135 = scmp.eq.s32.totalorder %s30, 0
      %p136 = por %p134, %p135
      %s138 = sadd.s32 %s137, 1
      %p141 = scmp.eq.s32.totalorder %s24, 11
      %p142 = scmp.ne.s32.totalorder %s137, %s139
      %p143 = scmp.eq.s32.totalorder %s24, 0
      %p144 = por %p142, %p143
      %p145 = scmp.ne.s32.totalorder %s137, %s139
      %p146 = scmp.eq.s32.totalorder %s29, 11
      %p147 = por %p145, %p146
      %p148 = scmp.ne.s32.totalorder %s139, %s140
      %p149 = scmp.eq.s32.totalorder %s29, 0
      %p150 = por %p148, %p149
      %p151 = scmp.ne.s32.totalorder %s139, %s140
      %p152 = scmp.eq.s32.totalorder %s30, 11
      %p153 = por %p151, %p152
      %p155 = scmp.ne.s32.totalorder %s140, %s154
      %p156 = scmp.eq.s32.totalorder %s30, 0
      %p157 = por %p155, %p156
      %s158 = ssub.s32 %s24, %s31
      %p159 = scmp.eq.s32.totalorder %s158, 0
      %s161 = sadd.s32 %s160, 1
      %s162 = scalar_select %p159, %s160, %s161
      %p165 = pneg %p159
      %p166 = scmp.eq.s32.totalorder %s24, 11
      %p167 = por %p165, %p166
      %p168 = scmp.ne.s32.totalorder %s160, %s163
      %p169 = scmp.eq.s32.totalorder %s24, 0
      %p170 = por %p168, %p169
      %p171 = scmp.ne.s32.totalorder %s160, %s163
      %p172 = scmp.eq.s32.totalorder %s29, 11
      %p173 = por %p171, %p172
      %p174 = scmp.ne.s32.totalorder %s163, %s164
      %p175 = scmp.eq.s32.totalorder %s29, 0
      %p176 = por %p174, %p175
      %p177 = scmp.ne.s32.totalorder %s163, %s164
      %p178 = scmp.eq.s32.totalorder %s30, 11
      %p179 = por %p177, %p178
      %p181 = scmp.ne.s32.totalorder %s164, %s180
      %p182 = scmp.eq.s32.totalorder %s30, 0
      %p183 = por %p181, %p182
      %s184 = ssub.s32 %s24, %s31
      %p185 = scmp.eq.s32.totalorder %s184, 0
      %s187 = sadd.s32 %s186, 1
      %s188 = scalar_select %p185, %s186, %s187
      %p191 = pneg %p185
      %p192 = scmp.eq.s32.totalorder %s24, 11
      %p193 = por %p191, %p192
      %p194 = scmp.ne.s32.totalorder %s186, %s189
      %p195 = scmp.eq.s32.totalorder %s24, 0
      %p196 = por %p194, %p195
      %p197 = scmp.ne.s32.totalorder %s186, %s189
      %p198 = scmp.eq.s32.totalorder %s29, 11
      %p199 = por %p197, %p198
      %p200 = scmp.ne.s32.totalorder %s189, %s190
      %p201 = scmp.eq.s32.totalorder %s29, 0
      %p202 = por %p200, %p201
      %p203 = scmp.ne.s32.totalorder %s189, %s190
      %p204 = scmp.eq.s32.totalorder %s30, 11
      %p205 = por %p203, %p204
      %p207 = scmp.ne.s32.totalorder %s190, %s206
      %p208 = scmp.eq.s32.totalorder %s30, 0
      %p209 = por %p207, %p208
      %p210 = scmp.le.s32.totalorder 1, %s24
      %p211 = scmp.lt.s32.totalorder %s24, 13
      %p212 = pnand %p210, %p211
      %p213 = pneg %p212
      // Predicated region
      $region9: #{char_rnn_sequence.1} parent=5 // pred_check
        _
      $region10: #{char_rnn_sequence.1} parent=5 // pred_check_branch
        %215 = sbr.rel (%p212) target = $region12
      $region11: #{char_rnn_sequence.1} parent=5 // pred_region
        %s216 = ssub.s32 %s24, 1
        // Predicated region
        $region13: #{char_rnn_sequence.1} parent=11 // pred_check
          %p217 = pneg %p45
        $region14: #{char_rnn_sequence.1} parent=11 // pred_check_branch
          %219 = sbr.rel (%p217) target = $region16
        $region15: #{char_rnn_sequence.1} parent=11 // pred_region
          _
        $region16: #{char_rnn_sequence.1} parent=11 // pred_fallthru
          _
        // Predicated region
        $region17: #{char_rnn_sequence.1} parent=11 // pred_check
          %p220 = pneg %p66
        $region18: #{char_rnn_sequence.1} parent=11 // pred_check_branch
          %222 = sbr.rel (%p220) target = $region20
        $region19: #{char_rnn_sequence.1} parent=11 // pred_region
          _
        $region20: #{char_rnn_sequence.1} parent=11 // pred_fallthru
          _
        // Predicated region
        $region21: #{char_rnn_sequence.1} parent=11 // pred_check
          %p223 = pneg %p87
        $region22: #{char_rnn_sequence.1} parent=11 // pred_check_branch
          %225 = sbr.rel (%p223) target = $region24
        $region23: #{char_rnn_sequence.1} parent=11 // pred_region
          _
        $region24: #{char_rnn_sequence.1} parent=11 // pred_fallthru
          _
        // Predicated region
        $region25: #{char_rnn_sequence.1} parent=11 // pred_check
          %p226 = pneg %p108
        $region26: #{char_rnn_sequence.1} parent=11 // pred_check_branch
          %228 = sbr.rel (%p226) target = $region28
        $region27: #{char_rnn_sequence.1} parent=11 // pred_region
          _
        $region28: #{char_rnn_sequence.1} parent=11 // pred_fallthru
          _
        // Predicated region
        $region29: #{char_rnn_sequence.1} parent=11 // pred_check
          %p229 = pneg %p129
        $region30: #{char_rnn_sequence.1} parent=11 // pred_check_branch
          %231 = sbr.rel (%p229) target = $region32
        $region31: #{char_rnn_sequence.1} parent=11 // pred_region
          _
        $region32: #{char_rnn_sequence.1} parent=11 // pred_fallthru
          _
        // Predicated region
        $region33: #{char_rnn_sequence.1} parent=11 // pred_check
          %p232 = pneg %p150
        $region34: #{char_rnn_sequence.1} parent=11 // pred_check_branch
          %234 = sbr.rel (%p232) target = $region36
        $region35: #{char_rnn_sequence.1} parent=11 // pred_region
          _
        $region36: #{char_rnn_sequence.1} parent=11 // pred_fallthru
          _
      $region12: #{char_rnn_sequence.1} parent=5 // pred_fallthru
        _
      %p235 = scmp.lt.s32.totalorder %s24, 12
      // Predicated region
      $region37: #{char_rnn_sequence.1} parent=5 // pred_check
        %p236 = pneg %p235
      $region38: #{char_rnn_sequence.1} parent=5 // pred_check_branch
        %238 = sbr.rel (%p236) target = $region40
      $region39: #{char_rnn_sequence.1} parent=5 // pred_region
        _
      $region40: #{char_rnn_sequence.1} parent=5 // pred_fallthru
        _
      %p239 = scmp.le.s32.totalorder 1, %s24
      %p240 = scmp.lt.s32.totalorder %s24, 13
      %p241 = pnand %p239, %p240
      %p242 = pneg %p241
      // Predicated region
      $region41: #{char_rnn_sequence.1} parent=5 // pred_check
        _
      $region42: #{char_rnn_sequence.1} parent=5 // pred_check_branch
        %244 = sbr.rel (%p241) target = $region44
      $region43: #{char_rnn_sequence.1} parent=5 // pred_region
        %s245 = ssub.s32 %s24, 1
        %p246 = pneg %p45
        %p247 = pneg %p42
        %p248 = pneg %p66
        %p249 = pneg %p63
        %p250 = pneg %p87
        %p251 = pneg %p84
        %p252 = pneg %p108
        %p253 = pneg %p105
        %p254 = pneg %p129
        %p255 = pneg %p126
        %p256 = pneg %p150
        %p257 = pneg %p147
        %p258 = pneg %p176
        %p259 = pneg %p173
        %p260 = scmp.lt.s32.totalorder %s29, 11
        %s261 = scalar_select %p260, %s29, 11
        %s262 = smul.addr %s261, 8
        %s263 = scalar_lea.vmem %s7, %s262
        %p264 = pneg %p202
        %p265 = pneg %p199
        %s266 = sand.u32 %s189, 1
        %s267 = scalar_lea.sflag [#allocation6], %s266
        %s268 = sand.u32 %s189, 1
        %s269 = smul.addr %s268, 8
        %s270 = scalar_lea.vmem [#allocation5], %s269
        %p271 = scmp.lt.s32.totalorder %s29, 11
        %s272 = scalar_select %p271, %s29, 11
        %s273 = smul.addr %s272, 8
        %s274 = scalar_lea.vmem %s7, %s273
        %p275 = scmp.eq.s32.totalorder %s29, 0
        // Predicated region
        $region45: #{char_rnn_sequence.1} parent=43 // pred_check
          %p276 = pneg %p275
        $region46: #{char_rnn_sequence.1} parent=43 // pred_check_branch
          %278 = sbr.rel (%p276) target = $region48
        $region47: #{char_rnn_sequence.1} parent=43 // pred_region
          %v279 = vld [vmem:[%s1] sm:$0xff]
          %280 = vst [vmem:[#allocation2] sm:$0xff] %v279
        $region48: #{char_rnn_sequence.1} parent=43 // pred_fallthru
          _
        %v281 = vlaneseq
        %v282 = vshrl.u32 %v281, 7
        %v283 = vlaneseq
        %v284 = vand.u32 %v283, 127
        %vm285 = vcmp.eq.s32.totalorder %v282, 0
        %s286 = smul.u32 %s29, 8
        %s287 = sld [smem:[#allocation4 + %s286]]
        %v288 = vstv %s287
        %v289 = vsel %vm285, %v288, 0
        %vm290 = vcmp.eq.s32.totalorder %v282, 1
        %s291 = sadd.s32 %s286, 1
        %s292 = sld [smem:[#allocation4 + %s291]]
        %v293 = vstv %s292
        %v294 = vsel %vm290, %v293, %v289
        %vm295 = vcmp.eq.s32.totalorder %v282, 2
        %s296 = sadd.s32 %s286, 2
        %s297 = sld [smem:[#allocation4 + %s296]]
        %v298 = vstv %s297
        %v299 = vsel %vm295, %v298, %v294
        %vm300 = vcmp.eq.s32.totalorder %v282, 3
        %s301 = sadd.s32 %s286, 3
        %s302 = sld [smem:[#allocation4 + %s301]]
        %v303 = vstv %s302
        %v304 = vsel %vm300, %v303, %v299
        %vm305 = vcmp.eq.s32.totalorder %v282, 4
        %s306 = sadd.s32 %s286, 4
        %s307 = sld [smem:[#allocation4 + %s306]]
        %v308 = vstv %s307
        %v309 = vsel %vm305, %v308, %v304
        %vm310 = vcmp.eq.s32.totalorder %v282, 5
        %s311 = sadd.s32 %s286, 5
        %s312 = sld [smem:[#allocation4 + %s311]]
        %v313 = vstv %s312
        %v314 = vsel %vm310, %v313, %v309
        %vm315 = vcmp.eq.s32.totalorder %v282, 6
        %s316 = sadd.s32 %s286, 6
        %s317 = sld [smem:[#allocation4 + %s316]]
        %v318 = vstv %s317
        %v319 = vsel %vm315, %v318, %v314
        %vm320 = vcmp.eq.s32.totalorder %v282, 7
        %s321 = sadd.s32 %s286, 7
        %s322 = sld [smem:[#allocation4 + %s321]]
        %v323 = vstv %s322
        %v324 = vsel %vm320, %v323, %v319
        %vm325 = vcmp.eq.s32.totalorder %v284, %v324
        %v326 = vsel %vm325, 1, 0
        %v327 = vcvt.s32.f32 %v326
        %v328 = vld [vmem:[#allocation2] sm:$0xff]
        %v329 = vld [vmem:[%s2] sm:$0xff]
        %v330 = vld [vmem:[%s2 + $0x8] sm:$0xff]
        %v331 = vld [vmem:[%s2 + $0x10] sm:$0xff]
        %v332 = vld [vmem:[%s2 + $0x18] sm:$0xff]
        %v333 = vld [vmem:[%s2 + $0x20] sm:$0xff]
        %v334 = vld [vmem:[%s2 + $0x28] sm:$0xff]
        %v335 = vld [vmem:[%s2 + $0x30] sm:$0xff]
        %v336 = vld [vmem:[%s2 + $0x38] sm:$0xff]
        %v337 = vld [vmem:[%s2 + $0x40] sm:$0xff]
        %v338 = vld [vmem:[%s2 + $0x48] sm:$0xff]
        %v339 = vld [vmem:[%s2 + $0x50] sm:$0xff]
        %v340 = vld [vmem:[%s2 + $0x58] sm:$0xff]
        %v341 = vld [vmem:[%s2 + $0x60] sm:$0xff]
        %v342 = vld [vmem:[%s2 + $0x68] sm:$0xff]
        %v343 = vld [vmem:[%s2 + $0x70] sm:$0xff]
        %v344 = vld [vmem:[%s2 + $0x78] sm:$0xff]
        %v345 = vld [vmem:[%s3] sm:$0xff]
        %v346 = vld [vmem:[%s3 + $0x8] sm:$0xff]
        %v347 = vld [vmem:[%s3 + $0x10] sm:$0xff]
        %v348 = vld [vmem:[%s3 + $0x18] sm:$0xff]
        %v349 = vld [vmem:[%s3 + $0x20] sm:$0xff]
        %v350 = vld [vmem:[%s3 + $0x28] sm:$0xff]
        %v351 = vld [vmem:[%s3 + $0x30] sm:$0xff]
        %v352 = vld [vmem:[%s3 + $0x38] sm:$0xff]
        %v353 = vld [vmem:[%s3 + $0x40] sm:$0xff]
        %v354 = vld [vmem:[%s3 + $0x48] sm:$0xff]
        %v355 = vld [vmem:[%s3 + $0x50] sm:$0xff]
        %v356 = vld [vmem:[%s3 + $0x58] sm:$0xff]
        %v357 = vld [vmem:[%s3 + $0x60] sm:$0xff]
        %v358 = vld [vmem:[%s3 + $0x68] sm:$0xff]
        %v359 = vld [vmem:[%s3 + $0x70] sm:$0xff]
        %v360 = vld [vmem:[%s3 + $0x78] sm:$0xff]
        %361 = vmatprep.subr.mxu0 0.0
        %362 = vmatpush1.msra.mxu0 %v360
        %363 = vmatprep.subr.mxu0 0.0
        %364 = vmatpush1.msra.mxu0 %v359
        %365 = vmatprep.subr.mxu0 0.0
        %366 = vmatpush1.msra.mxu0 %v358
        %367 = vmatprep.subr.mxu0 0.0
        %368 = vmatpush1.msra.mxu0 %v357
        %369 = vmatprep.subr.mxu0 0.0
        %370 = vmatpush1.msra.mxu0 %v356
        %371 = vmatprep.subr.mxu0 0.0
        %372 = vmatpush1.msra.mxu0 %v355
        %373 = vmatprep.subr.mxu0 0.0
        %374 = vmatpush1.msra.mxu0 %v354
        %375 = vmatprep.subr.mxu0 0.0
        %376 = vmatpush1.msra.mxu0 %v353
        %377 = vmatprep.subr.mxu0 0.0
        %378 = vmatpush1.msra.mxu0 %v352
        %379 = vmatprep.subr.mxu0 0.0
        %380 = vmatpush1.msra.mxu0 %v351
        %381 = vmatprep.subr.mxu0 0.0
        %382 = vmatpush1.msra.mxu0 %v350
        %383 = vmatprep.subr.mxu0 0.0
        %384 = vmatpush1.msra.mxu0 %v349
        %385 = vmatprep.subr.mxu0 0.0
        %386 = vmatpush1.msra.mxu0 %v348
        %387 = vmatprep.subr.mxu0 0.0
        %388 = vmatpush1.msra.mxu0 %v347
        %389 = vmatprep.subr.mxu0 0.0
        %390 = vmatpush1.msra.mxu0 %v346
        %391 = vmatprep.subr.mxu0 0.0
        %392 = vmatpush1.msra.mxu0 %v345
        %393 = vmatprep.subr.mxu0 0.0
        %394 = vmatpush2.msra.mxu0 0.0
        %395 = vmatprep.subr.mxu0 0.0
        %396 = vmatpush2.msra.mxu0 0.0
        %397 = vmatprep.subr.mxu0 0.0
        %398 = vmatpush2.msra.mxu0 0.0
        %399 = vmatprep.subr.mxu0 0.0
        %400 = vmatpush2.msra.mxu0 0.0
        %401 = vmatprep.subr.mxu0 0.0
        %402 = vmatpush2.msra.mxu0 0.0
        %403 = vmatprep.subr.mxu0 0.0
        %404 = vmatpush2.msra.mxu0 0.0
        %405 = vmatprep.subr.mxu0 0.0
        %406 = vmatpush2.msra.mxu0 0.0
        %407 = vmatprep.subr.mxu0 0.0
        %408 = vmatpush2.msra.mxu0 0.0
        %409 = vmatprep.subr.mxu0 0.0
        %410 = vmatpush2.msra.mxu0 0.0
        %411 = vmatprep.subr.mxu0 0.0
        %412 = vmatpush2.msra.mxu0 0.0
        %413 = vmatprep.subr.mxu0 0.0
        %414 = vmatpush2.msra.mxu0 0.0
        %415 = vmatprep.subr.mxu0 0.0
        %416 = vmatpush2.msra.mxu0 0.0
        %417 = vmatprep.subr.mxu0 0.0
        %418 = vmatpush2.msra.mxu0 0.0
        %419 = vmatprep.subr.mxu0 0.0
        %420 = vmatpush2.msra.mxu0 0.0
        %421 = vmatprep.subr.mxu0 0.0
        %422 = vmatpush2.msra.mxu0 0.0
        %423 = vmatprep.subr.mxu0 0.0
        %424 = vmatpush2.msra.mxu0 0.0
        %425 = vmatprep.mubr.f32.mxu0 0.0
        %426 = vmatmul.mubr.f32.gmra.mxu0 %v328
        %v427 = vpop.f32.mrf.mxu0
        %v428 = vadd.f32 0.0, %v427
        %v429 = vpop.f32.mrf.mxu0
        %430 = vdwg.mxu0
        %431 = vmatprep.subr.mxu0 0.0
        %432 = vmatpush1.msra.mxu0 %v344
        %433 = vmatprep.subr.mxu0 0.0
        %434 = vmatpush1.msra.mxu0 %v343
        %435 = vmatprep.subr.mxu0 0.0
        %436 = vmatpush1.msra.mxu0 %v342
        %437 = vmatprep.subr.mxu0 0.0
        %438 = vmatpush1.msra.mxu0 %v341
        %439 = vmatprep.subr.mxu0 0.0
        %440 = vmatpush1.msra.mxu0 %v340
        %441 = vmatprep.subr.mxu0 0.0
        %442 = vmatpush1.msra.mxu0 %v339
        %443 = vmatprep.subr.mxu0 0.0
        %444 = vmatpush1.msra.mxu0 %v338
        %445 = vmatprep.subr.mxu0 0.0
        %446 = vmatpush1.msra.mxu0 %v337
        %447 = vmatprep.subr.mxu0 0.0
        %448 = vmatpush1.msra.mxu0 %v336
        %449 = vmatprep.subr.mxu0 0.0
        %450 = vmatpush1.msra.mxu0 %v335
        %451 = vmatprep.subr.mxu0 0.0
        %452 = vmatpush1.msra.mxu0 %v334
        %453 = vmatprep.subr.mxu0 0.0
        %454 = vmatpush1.msra.mxu0 %v333
        %455 = vmatprep.subr.mxu0 0.0
        %456 = vmatpush1.msra.mxu0 %v332
        %457 = vmatprep.subr.mxu0 0.0
        %458 = vmatpush1.msra.mxu0 %v331
        %459 = vmatprep.subr.mxu0 0.0
        %460 = vmatpush1.msra.mxu0 %v330
        %461 = vmatprep.subr.mxu0 0.0
        %462 = vmatpush1.msra.mxu0 %v329
        %463 = vmatprep.subr.mxu0 0.0
        %464 = vmatpush2.msra.mxu0 0.0
        %465 = vmatprep.subr.mxu0 0.0
        %466 = vmatpush2.msra.mxu0 0.0
        %467 = vmatprep.subr.mxu0 0.0
        %468 = vmatpush2.msra.mxu0 0.0
        %469 = vmatprep.subr.mxu0 0.0
        %470 = vmatpush2.msra.mxu0 0.0
        %471 = vmatprep.subr.mxu0 0.0
        %472 = vmatpush2.msra.mxu0 0.0
        %473 = vmatprep.subr.mxu0 0.0
        %474 = vmatpush2.msra.mxu0 0.0
        %475 = vmatprep.subr.mxu0 0.0
        %476 = vmatpush2.msra.mxu0 0.0
        %477 = vmatprep.subr.mxu0 0.0
        %478 = vmatpush2.msra.mxu0 0.0
        %479 = vmatprep.subr.mxu0 0.0
        %480 = vmatpush2.msra.mxu0 0.0
        %481 = vmatprep.subr.mxu0 0.0
        %482 = vmatpush2.msra.mxu0 0.0
        %483 = vmatprep.subr.mxu0 0.0
        %484 = vmatpush2.msra.mxu0 0.0
        %485 = vmatprep.subr.mxu0 0.0
        %486 = vmatpush2.msra.mxu0 0.0
        %487 = vmatprep.subr.mxu0 0.0
        %488 = vmatpush2.msra.mxu0 0.0
        %489 = vmatprep.subr.mxu0 0.0
        %490 = vmatpush2.msra.mxu0 0.0
        %491 = vmatprep.subr.mxu0 0.0
        %492 = vmatpush2.msra.mxu0 0.0
        %493 = vmatprep.subr.mxu0 0.0
        %494 = vmatpush2.msra.mxu0 0.0
        %495 = vmatprep.mubr.f32.mxu0 0.0
        %496 = vmatmul.mubr.f32.gmra.mxu0 %v327
        %v497 = vpop.f32.mrf.mxu0
        %v498 = vadd.f32 %v428, %v497
        %v499 = vpop.f32.mrf.mxu0
        %500 = vdwg.mxu0
        %v501 = vld [vmem:[%s4] sm:$0x1]
        %v503 = vlaneseq
        %v504 = vshrl.u32 %v503, 7
        %v505 = vsub.s32 0, %v504
        %v506 = vrot.slane %v501, %v505
        %v508 = vadd.f32 %v498, %v506
        %v509 = vtanh.pop %v508
        %510 = vst [vmem:[#allocation2] sm:$0xff] %v509
        %v511 = vld [vmem:[%s5] sm:$0xff]
        %v512 = vld [vmem:[%s5 + $0x8] sm:$0xff]
        %v513 = vld [vmem:[%s5 + $0x10] sm:$0xff]
        %v514 = vld [vmem:[%s5 + $0x18] sm:$0xff]
        %v515 = vld [vmem:[%s5 + $0x20] sm:$0xff]
        %v516 = vld [vmem:[%s5 + $0x28] sm:$0xff]
        %v517 = vld [vmem:[%s5 + $0x30] sm:$0xff]
        %v518 = vld [vmem:[%s5 + $0x38] sm:$0xff]
        %v519 = vld [vmem:[%s5 + $0x40] sm:$0xff]
        %v520 = vld [vmem:[%s5 + $0x48] sm:$0xff]
        %v521 = vld [vmem:[%s5 + $0x50] sm:$0xff]
        %v522 = vld [vmem:[%s5 + $0x58] sm:$0xff]
        %v523 = vld [vmem:[%s5 + $0x60] sm:$0xff]
        %v524 = vld [vmem:[%s5 + $0x68] sm:$0xff]
        %v525 = vld [vmem:[%s5 + $0x70] sm:$0xff]
        %v526 = vld [vmem:[%s5 + $0x78] sm:$0xff]
        %v527 = vld [vmem:[%s6] sm:$0x1]
        %v529 = vlaneseq
        %v530 = vshrl.u32 %v529, 7
        %v531 = vsub.s32 0, %v530
        %v532 = vrot.slane %v527, %v531
        %534 = vmatprep.subr.mxu0 0.0
        %535 = vmatpush1.msra.mxu0 %v526
        %536 = vmatprep.subr.mxu0 0.0
        %537 = vmatpush1.msra.mxu0 %v525
        %538 = vmatprep.subr.mxu0 0.0
        %539 = vmatpush1.msra.mxu0 %v524
        %540 = vmatprep.subr.mxu0 0.0
        %541 = vmatpush1.msra.mxu0 %v523
        %542 = vmatprep.subr.mxu0 0.0
        %543 = vmatpush1.msra.mxu0 %v522
        %544 = vmatprep.subr.mxu0 0.0
        %545 = vmatpush1.msra.mxu0 %v521
        %546 = vmatprep.subr.mxu0 0.0
        %547 = vmatpush1.msra.mxu0 %v520
        %548 = vmatprep.subr.mxu0 0.0
        %549 = vmatpush1.msra.mxu0 %v519
        %550 = vmatprep.subr.mxu0 0.0
        %551 = vmatpush1.msra.mxu0 %v518
        %552 = vmatprep.subr.mxu0 0.0
        %553 = vmatpush1.msra.mxu0 %v517
        %554 = vmatprep.subr.mxu0 0.0
        %555 = vmatpush1.msra.mxu0 %v516
        %556 = vmatprep.subr.mxu0 0.0
        %557 = vmatpush1.msra.mxu0 %v515
        %558 = vmatprep.subr.mxu0 0.0
        %559 = vmatpush1.msra.mxu0 %v514
        %560 = vmatprep.subr.mxu0 0.0
        %561 = vmatpush1.msra.mxu0 %v513
        %562 = vmatprep.subr.mxu0 0.0
        %563 = vmatpush1.msra.mxu0 %v512
        %564 = vmatprep.subr.mxu0 0.0
        %565 = vmatpush1.msra.mxu0 %v511
        %566 = vmatprep.subr.mxu0 0.0
        %567 = vmatpush2.msra.mxu0 0.0
        %568 = vmatprep.subr.mxu0 0.0
        %569 = vmatpush2.msra.mxu0 0.0
        %570 = vmatprep.subr.mxu0 0.0
        %571 = vmatpush2.msra.mxu0 0.0
        %572 = vmatprep.subr.mxu0 0.0
        %573 = vmatpush2.msra.mxu0 0.0
        %574 = vmatprep.subr.mxu0 0.0
        %575 = vmatpush2.msra.mxu0 0.0
        %576 = vmatprep.subr.mxu0 0.0
        %577 = vmatpush2.msra.mxu0 0.0
        %578 = vmatprep.subr.mxu0 0.0
        %579 = vmatpush2.msra.mxu0 0.0
        %580 = vmatprep.subr.mxu0 0.0
        %581 = vmatpush2.msra.mxu0 0.0
        %582 = vmatprep.subr.mxu0 0.0
        %583 = vmatpush2.msra.mxu0 0.0
        %584 = vmatprep.subr.mxu0 0.0
        %585 = vmatpush2.msra.mxu0 0.0
        %586 = vmatprep.subr.mxu0 0.0
        %587 = vmatpush2.msra.mxu0 0.0
        %588 = vmatprep.subr.mxu0 0.0
        %589 = vmatpush2.msra.mxu0 0.0
        %590 = vmatprep.subr.mxu0 0.0
        %591 = vmatpush2.msra.mxu0 0.0
        %592 = vmatprep.subr.mxu0 0.0
        %593 = vmatpush2.msra.mxu0 0.0
        %594 = vmatprep.subr.mxu0 0.0
        %595 = vmatpush2.msra.mxu0 0.0
        %596 = vmatprep.subr.mxu0 0.0
        %597 = vmatpush2.msra.mxu0 0.0
        %598 = vmatprep.mubr.f32.mxu0 0.0
        %599 = vmatmul.mubr.f32.gmra.mxu0 %v509
        %v600 = vpop.f32.mrf.mxu0
        %v601 = vadd.f32 %v532, %v600
        %v602 = vpop.f32.mrf.mxu0
        %603 = vdwg.mxu0
        %604 = vmax.xlane.f32.xlu0 %v601
        %v605 = vpop.xlane.xlu0 %604
        %v606 = vsub.f32 %v601, %v605
        %v607 = vmul.f32 %v606, 1.442695
        %v608 = vpow.pop %v607
        %609 = vadd.xlane.f32.xlu0 %v608
        %v610 = vpop.xlane.xlu0 %609
        %v611 = vlog2.pop %v610
        %v612 = vmul.f32 %v611, 0.6931472
        %v613 = vsub.f32 %v606, %v612
        %614 = vst [vmem:[%s274] sm:$0xff] %v509
        %615 = vst [vmem:[%s270] sm:$0xff] %v613
        %p616 = scmp.lt.s32.totalorder %s29, 11
        %s617 = scalar_select %p616, %s29, 11
        %s618 = smul.addr %s617, 8
        %s619 = scalar_lea.vmem %s7, %s618
        %s620 = sand.u32 %s189, 1
        %s621 = scalar_lea.sflag [#allocation6], %s620
        %s622 = sand.u32 %s189, 1
        %s623 = smul.addr %s622, 8
        %s624 = scalar_lea.vmem [#allocation5], %s623
        // Predicated region
        $region49: #{char_rnn_sequence.1} parent=43 // pred_check
          %p625 = pneg %p173
        $region50: #{char_rnn_sequence.1} parent=43 // pred_check_branch
          %627 = sbr.rel (%p625) target = $region52
        $region51: #{char_rnn_sequence.1} parent=43 // pred_region
          _
        $region52: #{char_rnn_sequence.1} parent=43 // pred_fallthru
          _
        // Predicated region
        $region53: #{char_rnn_sequence.1} parent=43 // pred_check
          %p628 = pneg %p199
        $region54: #{char_rnn_sequence.1} parent=43 // pred_check_branch
          %630 = sbr.rel (%p628) target = $region56
        $region55: #{char_rnn_sequence.1} parent=43 // pred_region
          %s632 = ssub.s32 128, 128
          %633 = vsyncadd %s621, %s632
          %s634 = smul.addr %s29, 128
          %s635 = scalar_lea.hbm %s8, %s634
          %s637 = sshll.u32 %s624, 4
          %s638 = int_to_ptr.vmem [resolvable:$true] %s637
          %640 = dma.vmem_to_hbm [thread:$0]  %s638, 128, %s635, %s621
        $region56: #{char_rnn_sequence.1} parent=43 // pred_fallthru
          _
      $region44: #{char_rnn_sequence.1} parent=5 // pred_fallthru
        _
      %p641 = scmp.le.s32.totalorder 2, %s24
      // Predicated region
      $region57: #{char_rnn_sequence.1} parent=5 // pred_check
        %p642 = pneg %p641
      $region58: #{char_rnn_sequence.1} parent=5 // pred_check_branch
        %644 = sbr.rel (%p642) target = $region60
      $region59: #{char_rnn_sequence.1} parent=5 // pred_region
        %s645 = ssub.s32 %s24, 2
        // Predicated region
        $region61: #{char_rnn_sequence.1} parent=59 // pred_check
          %p646 = pneg %p179
        $region62: #{char_rnn_sequence.1} parent=59 // pred_check_branch
          %648 = sbr.rel (%p646) target = $region64
        $region63: #{char_rnn_sequence.1} parent=59 // pred_region
          %p649 = scmp.lt.s32.totalorder %s30, 11
          %s650 = scalar_select %p649, %s30, 11
          %s651 = smul.addr %s650, 8
          %s652 = scalar_lea.vmem %s7, %s651
        $region64: #{char_rnn_sequence.1} parent=59 // pred_fallthru
          _
        // Predicated region
        $region65: #{char_rnn_sequence.1} parent=59 // pred_check
          %p653 = pneg %p205
        $region66: #{char_rnn_sequence.1} parent=59 // pred_check_branch
          %655 = sbr.rel (%p653) target = $region68
        $region67: #{char_rnn_sequence.1} parent=59 // pred_region
          %s656 = sand.u32 %s190, 1
          %s657 = scalar_lea.sflag [#allocation6], %s656
          %s658 = sand.u32 %s190, 1
          %s659 = smul.addr %s658, 8
          %s660 = scalar_lea.vmem [#allocation5], %s659
          %661 = dma.done %s657, 128
        $region68: #{char_rnn_sequence.1} parent=59 // pred_fallthru
          _
      $region60: #{char_rnn_sequence.1} parent=5 // pred_fallthru
        _
    $region6: #{char_rnn_sequence.1} parent=1 // loop_footer
      %s28 = sadd.s32 1, %s24
    $region7: #{char_rnn_sequence.1} parent=1 // loop_footer_branch
      %23 = sbr.rel target = $region3
    $region8: #{char_rnn_sequence.1} parent=1 // loop_exit
      _
    %662 = vsyncpa [#allocation6], 1
    %s663 = scalar_lea.sflag [#allocation6], 1
    %664 = vsyncpa %s663, 1

</llo_original>
